<compile_context>
chip_gen: v7x
topology: tpu7x:2x2x1
jax: 0.10.0
libtpu: 0.0.40
codegen_flags: <defaults>
</compile_context>

<pallas_src>
import functools

import jax
import jax.numpy as jnp
from jax import lax
from jax.experimental import pallas as pl
from jax.experimental.pallas import tpu as pltpu


def _normal_conv_kernel(x_ref, gamma_ref, beta_ref, w_ref, b_ref, mask_ref, out_ref,
                        *, H, W, HW, B, groups, c_pad, eps, slope):
    # x_ref:     (C, B*HW)        VMEM  (lane-dense; samples concatenated along lanes)
    # gamma_ref: (C, 1)           VMEM
    # beta_ref:  (C, 1)           VMEM
    # w_ref:     (C_out, 9*c_pad) VMEM  columns ordered (ky, kx, ci padded to c_pad)
    # b_ref:     (C_out, 1)       VMEM
    # mask_ref:  (9, B*HW)        VMEM  precomputed f32 boundary masks (grid-invariant)
    # out_ref:   (C_out, B*HW)    VMEM
    C = x_ref.shape[0]
    BHW = x_ref.shape[1]
    Cg = C // groups
    inv_cnt = 1.0 / float(Cg * HW)           # multiply instead of divide

    x = x_ref[...]                            # (C, B*HW) f32
    gamma = gamma_ref[...]                    # (C, 1)
    beta = beta_ref[...]                      # (C, 1)
    masks = mask_ref[...]                     # (9, B*HW)

    # ---- GroupNorm (per sample, per group; two-pass variance) + LeakyReLU ----
    sample_parts = []
    for b in range(B):
        group_parts = []
        for g in range(groups):
            xg = x[g * Cg:(g + 1) * Cg, b * HW:(b + 1) * HW]          # (Cg, HW)
            mu = jnp.sum(jnp.sum(xg, axis=1, keepdims=True),
                         axis=0, keepdims=True) * inv_cnt             # (1, 1)
            d = xg - mu
            var = jnp.sum(jnp.sum(d * d, axis=1, keepdims=True),
                          axis=0, keepdims=True) * inv_cnt            # biased var
            inv = lax.rsqrt(var + eps)                                # EUP slot
            yg = d * inv * gamma[g * Cg:(g + 1) * Cg, :] + beta[g * Cg:(g + 1) * Cg, :]
            yg = jnp.where(yg >= 0, yg, slope * yg)                   # LeakyReLU
            group_parts.append(yg)
        yb = group_parts[0] if groups == 1 else jnp.concatenate(group_parts, axis=0)
        sample_parts.append(yb)
    y = sample_parts[0] if B == 1 else jnp.concatenate(sample_parts, axis=1)  # (C, B*HW)

    # ---- 3x3 conv, padding=1: shifted taps via pltpu.roll (XLU) * precomputed
    #      masks, each tap padded to c_pad rows, then one im2col MXU matmul. ----
    zpad = None
    if c_pad != C:
        zpad = jnp.zeros((c_pad - C, BHW), dtype=y.dtype)

    taps = []
    t = 0
    for oy in (-1, 0, 1):                     # tap order matches weight column order
        for ox in (-1, 0, 1):
            k = oy * W + ox                   # flat-index offset of this tap
            shifted = pltpu.roll(y, (-k) % BHW, axis=1) if k != 0 else y
            # cross-sample / out-of-image wrap positions are exactly the masked ones
            taps.append(shifted * masks[t:t + 1, :])
            if zpad is not None:
                taps.append(zpad)             # sublane-align each tap block to 8 rows
            t += 1
    patches = jnp.concatenate(taps, axis=0)   # (9*c_pad, B*HW)

    out = jnp.dot(w_ref[...], patches, preferred_element_type=jnp.float32)
    out = out + b_ref[...]                    # (C_out, B*HW)
    out_ref[...] = out.astype(out_ref.dtype)


def normal_conv(x, gamma, beta, wconv, bconv, *, eps=1e-5, slope=0.01):
    """x: (N, C, H, W) f32; wconv: (C_out, C_in, 3, 3); returns (N, C_out, H, W)."""
    N, C, H, W = x.shape
    C_out = wconv.shape[0]
    HW = H * W
    G = 8 if C >= 8 else 1                     # matches the PyTorch module
    assert C % G == 0, "num_channels must be divisible by num_groups"

    # Grid: keep 2 parallel steps when possible (v7x has 2 TCs); B samples per step
    # amortizes the per-step fixed cost on v5e/v6e as N grows.
    S = 2 if N >= 2 else 1
    B = -(-N // S)
    if S > 1 and (B * HW) % 128 != 0:          # lane block must stay (…,128)-aligned
        S, B = 1, N
    N_pad = S * B

    # Lane-dense layouts (layout plumbing done in the wrapper).
    x2 = x.reshape(N, C, HW)
    if N_pad != N:
        x2 = jnp.concatenate([x2, jnp.zeros((N_pad - N, C, HW), x.dtype)], axis=0)
    x2 = jnp.transpose(x2, (1, 0, 2)).reshape(C, N_pad * HW)      # (C, N_pad*HW)

    C_pad = ((C + 7) // 8) * 8                 # 8-row alignment per tap block
    K = 9 * C_pad
    w_t = jnp.transpose(wconv, (0, 2, 3, 1))   # (C_out, ky, kx, ci)
    if C_pad != C:
        w_t = jnp.pad(w_t, ((0, 0), (0, 0), (0, 0), (0, C_pad - C)))
    w_mat = w_t.reshape(C_out, K).astype(jnp.float32)

    gamma2 = gamma.reshape(C, 1).astype(jnp.float32)
    beta2 = beta.reshape(C, 1).astype(jnp.float32)
    b2 = bconv.reshape(C_out, 1).astype(jnp.float32)

    # Precompute the 9 boundary masks once (grid-invariant), tiled over B samples.
    pos = jnp.arange(HW, dtype=jnp.int32)
    hh = pos // W
    ww = pos % W
    mask_rows = []
    for oy in (-1, 0, 1):
        for ox in (-1, 0, 1):
            valid = (hh >= -oy) & (hh < H - oy) & (ww >= -ox) & (ww < W - ox)
            mask_rows.append(jnp.tile(valid.astype(jnp.float32), B))
    masks = jnp.stack(mask_rows, axis=0)       # (9, B*HW)

    kernel = functools.partial(_normal_conv_kernel, H=H, W=W, HW=HW, B=B,
                               groups=G, c_pad=C_pad, eps=eps, slope=slope)

    out = pl.pallas_call(
        kernel,
        out_shape=jax.ShapeDtypeStruct((C_out, N_pad * HW), x.dtype),
        grid_spec=pltpu.PrefetchScalarGridSpec(
            num_scalar_prefetch=0,
            grid=(S,),
            in_specs=[
                pl.BlockSpec((C, B * HW), lambda s: (0, s)),
                pl.BlockSpec((C, 1), lambda s: (0, 0)),
                pl.BlockSpec((C, 1), lambda s: (0, 0)),
                pl.BlockSpec((C_out, K), lambda s: (0, 0)),
                pl.BlockSpec((C_out, 1), lambda s: (0, 0)),
                pl.BlockSpec((9, B * HW), lambda s: (0, 0)),
            ],
            out_specs=pl.BlockSpec((C_out, B * HW), lambda s: (0, s)),
        ),
        compiler_params=pltpu.CompilerParams(dimension_semantics=("parallel",)),
    )(x2, gamma2, beta2, w_mat, b2, masks)

    out = out.reshape(C_out, N_pad, H, W).transpose(1, 0, 2, 3)[:N]
    return out


def reference_forward(x, gamma, beta, wconv, bconv):
    """Plain-JAX reference mirroring the PyTorch module."""
    N, C, H, W = x.shape
    G = 8 if C >= 8 else 1
    xr = x.reshape(N, G, C // G, H, W)
    mu = xr.mean(axis=(2, 3, 4), keepdims=True)
    var = xr.var(axis=(2, 3, 4), keepdims=True)
    y = ((xr - mu) / jnp.sqrt(var + 1e-5)).reshape(N, C, H, W)
    y = y * gamma[None, :, None, None] + beta[None, :, None, None]
    y = jnp.where(y >= 0, y, 0.01 * y)
    out = lax.conv_general_dilated(
        y, wconv, window_strides=(1, 1), padding=((1, 1), (1, 1)),
        dimension_numbers=("NCHW", "OIHW", "NCHW"),
        precision=lax.Precision.HIGHEST)
    return out + bconv[None, :, None, None]


if __name__ == "__main__":
    N, C_in, C_out, H, W = 2, 4, 8, 16, 16

    key = jax.random.PRNGKey(0)
    kx, kw, kb = jax.random.split(key, 3)

    x = jax.random.normal(kx, (N, C_in, H, W), dtype=jnp.float32)

    # Conv2d default init (kaiming-uniform-ish bounds), GroupNorm default affine.
    fan_in = C_in * 3 * 3
    bound = 1.0 / (fan_in ** 0.5)
    wconv = jax.random.uniform(kw, (C_out, C_in, 3, 3), jnp.float32, -bound, bound)
    bconv = jax.random.uniform(kb, (C_out,), jnp.float32, -bound, bound)
    gamma = jnp.ones((C_in,), jnp.float32)
    beta = jnp.zeros((C_in,), jnp.float32)

    out = normal_conv(x, gamma, beta, wconv, bconv)
    out = jax.block_until_ready(out)

    ref = jax.block_until_ready(reference_forward(x, gamma, beta, wconv, bconv))
    assert out.shape == (N, C_out, H, W), out.shape
    assert bool(jnp.allclose(out, ref, rtol=1e-3, atol=1e-3)), "mismatch vs reference"

    print("KERNEL_OK")
</pallas_src>

<mosaic_0001>
module attributes {stable_mosaic.version = 11 : i64} {
  func.func @_normal_conv_kernel(%arg0: i32, %arg1: memref<4x256xf32, #tpu.memory_space<vmem>>, %arg2: memref<4x1xf32, #tpu.memory_space<vmem>>, %arg3: memref<4x1xf32, #tpu.memory_space<vmem>>, %arg4: memref<8x72xf32, #tpu.memory_space<vmem>>, %arg5: memref<8x1xf32, #tpu.memory_space<vmem>>, %arg6: memref<9x256xf32, #tpu.memory_space<vmem>>, %arg7: memref<8x256xf32, #tpu.memory_space<vmem>>) attributes {dimension_semantics = [#tpu.dimension_semantics<parallel>], iteration_bounds = array<i64: 2>, scalar_prefetch = 0 : i64, scratch_operands = 0 : i64, tpu.core_type = #tpu.core_type<tc>, window_params = [{transform_indices = @transform_0, window_bounds = array<i64: 4, 256>}, {pipeline_mode = #tpu.pipeline_mode<synchronous>, transform_indices = @transform_1, window_bounds = array<i64: 4, 1>}, {pipeline_mode = #tpu.pipeline_mode<synchronous>, transform_indices = @transform_2, window_bounds = array<i64: 4, 1>}, {pipeline_mode = #tpu.pipeline_mode<synchronous>, transform_indices = @transform_3, window_bounds = array<i64: 8, 72>}, {pipeline_mode = #tpu.pipeline_mode<synchronous>, transform_indices = @transform_4, window_bounds = array<i64: 8, 1>}, {pipeline_mode = #tpu.pipeline_mode<synchronous>, transform_indices = @transform_5, window_bounds = array<i64: 9, 256>}, {transform_indices = @transform_6, window_bounds = array<i64: 8, 256>}]} {
    %c0 = arith.constant 0 : index
    %c0_0 = arith.constant 0 : index
    %0 = vector.load %arg1[%c0, %c0_0] : memref<4x256xf32, #tpu.memory_space<vmem>>, vector<4x256xf32>
    %c0_1 = arith.constant 0 : index
    %c0_2 = arith.constant 0 : index
    %1 = vector.load %arg2[%c0_1, %c0_2] : memref<4x1xf32, #tpu.memory_space<vmem>>, vector<4x1xf32>
    %c0_3 = arith.constant 0 : index
    %c0_4 = arith.constant 0 : index
    %2 = vector.load %arg3[%c0_3, %c0_4] : memref<4x1xf32, #tpu.memory_space<vmem>>, vector<4x1xf32>
    %c0_5 = arith.constant 0 : index
    %c0_6 = arith.constant 0 : index
    %3 = vector.load %arg6[%c0_5, %c0_6] : memref<9x256xf32, #tpu.memory_space<vmem>>, vector<9x256xf32>
    %cst = arith.constant dense<0.000000e+00> : vector<4xf32>
    %4 = vector.multi_reduction <add>, %0, %cst [1] : vector<4x256xf32> to vector<4xf32>
    %5 = vector.shape_cast %4 : vector<4xf32> to vector<4x1xf32>
    %cst_7 = arith.constant dense<0.000000e+00> : vector<1xf32>
    %6 = vector.multi_reduction <add>, %5, %cst_7 [0] : vector<4x1xf32> to vector<1xf32>
    %7 = vector.shape_cast %6 : vector<1xf32> to vector<1x1xf32>
    %cst_8 = arith.constant 9.765625E-4 : f32
    %8 = vector.broadcast %cst_8 : f32 to vector<1x1xf32>
    %9 = arith.mulf %7, %8 : vector<1x1xf32>
    %10 = vector.broadcast %9 : vector<1x1xf32> to vector<4x256xf32>
    %11 = arith.subf %0, %10 : vector<4x256xf32>
    %12 = arith.mulf %11, %11 : vector<4x256xf32>
    %cst_9 = arith.constant dense<0.000000e+00> : vector<4xf32>
    %13 = vector.multi_reduction <add>, %12, %cst_9 [1] : vector<4x256xf32> to vector<4xf32>
    %14 = vector.shape_cast %13 : vector<4xf32> to vector<4x1xf32>
    %cst_10 = arith.constant dense<0.000000e+00> : vector<1xf32>
    %15 = vector.multi_reduction <add>, %14, %cst_10 [0] : vector<4x1xf32> to vector<1xf32>
    %16 = vector.shape_cast %15 : vector<1xf32> to vector<1x1xf32>
    %cst_11 = arith.constant 9.765625E-4 : f32
    %17 = vector.broadcast %cst_11 : f32 to vector<1x1xf32>
    %18 = arith.mulf %16, %17 : vector<1x1xf32>
    %cst_12 = arith.constant 9.99999974E-6 : f32
    %19 = vector.broadcast %cst_12 : f32 to vector<1x1xf32>
    %20 = arith.addf %18, %19 : vector<1x1xf32>
    %21 = math.rsqrt %20 : vector<1x1xf32>
    %22 = vector.broadcast %21 : vector<1x1xf32> to vector<4x256xf32>
    %23 = arith.mulf %11, %22 : vector<4x256xf32>
    %24 = vector.broadcast %1 : vector<4x1xf32> to vector<4x256xf32>
    %25 = arith.mulf %23, %24 : vector<4x256xf32>
    %26 = vector.broadcast %2 : vector<4x1xf32> to vector<4x256xf32>
    %27 = arith.addf %25, %26 : vector<4x256xf32>
    %cst_13 = arith.constant 0.000000e+00 : f32
    %28 = vector.broadcast %cst_13 : f32 to vector<4x256xf32>
    %29 = arith.cmpf oge, %27, %28 : vector<4x256xf32>
    %cst_14 = arith.constant 0.00999999977 : f32
    %30 = vector.broadcast %cst_14 : f32 to vector<4x256xf32>
    %31 = arith.mulf %30, %27 : vector<4x256xf32>
    %32 = arith.select %29, %27, %31 : vector<4x256xi1>, vector<4x256xf32>
    %cst_15 = arith.constant 0.000000e+00 : f32
    %33 = vector.broadcast %cst_15 : f32 to vector<4x256xf32>
    %c17_i32 = arith.constant 17 : i32
    %34 = tpu.dynamic_rotate %32 by %c17_i32 dim 1 : vector<4x256xf32>, i32 -> vector<4x256xf32>
    %35 = vector.extract_strided_slice %3 {offsets = [0, 0], sizes = [1, 256], strides = [1, 1]} : vector<9x256xf32> to vector<1x256xf32>
    %36 = vector.broadcast %35 : vector<1x256xf32> to vector<4x256xf32>
    %37 = arith.mulf %34, %36 : vector<4x256xf32>
    %c16_i32 = arith.constant 16 : i32
    %38 = tpu.dynamic_rotate %32 by %c16_i32 dim 1 : vector<4x256xf32>, i32 -> vector<4x256xf32>
    %39 = vector.extract_strided_slice %3 {offsets = [1, 0], sizes = [1, 256], strides = [1, 1]} : vector<9x256xf32> to vector<1x256xf32>
    %40 = vector.broadcast %39 : vector<1x256xf32> to vector<4x256xf32>
    %41 = arith.mulf %38, %40 : vector<4x256xf32>
    %c15_i32 = arith.constant 15 : i32
    %42 = tpu.dynamic_rotate %32 by %c15_i32 dim 1 : vector<4x256xf32>, i32 -> vector<4x256xf32>
    %43 = vector.extract_strided_slice %3 {offsets = [2, 0], sizes = [1, 256], strides = [1, 1]} : vector<9x256xf32> to vector<1x256xf32>
    %44 = vector.broadcast %43 : vector<1x256xf32> to vector<4x256xf32>
    %45 = arith.mulf %42, %44 : vector<4x256xf32>
    %c1_i32 = arith.constant 1 : i32
    %46 = tpu.dynamic_rotate %32 by %c1_i32 dim 1 : vector<4x256xf32>, i32 -> vector<4x256xf32>
    %47 = vector.extract_strided_slice %3 {offsets = [3, 0], sizes = [1, 256], strides = [1, 1]} : vector<9x256xf32> to vector<1x256xf32>
    %48 = vector.broadcast %47 : vector<1x256xf32> to vector<4x256xf32>
    %49 = arith.mulf %46, %48 : vector<4x256xf32>
    %50 = vector.extract_strided_slice %3 {offsets = [4, 0], sizes = [1, 256], strides = [1, 1]} : vector<9x256xf32> to vector<1x256xf32>
    %51 = vector.broadcast %50 : vector<1x256xf32> to vector<4x256xf32>
    %52 = arith.mulf %32, %51 : vector<4x256xf32>
    %c255_i32 = arith.constant 255 : i32
    %53 = tpu.dynamic_rotate %32 by %c255_i32 dim 1 : vector<4x256xf32>, i32 -> vector<4x256xf32>
    %54 = vector.extract_strided_slice %3 {offsets = [5, 0], sizes = [1, 256], strides = [1, 1]} : vector<9x256xf32> to vector<1x256xf32>
    %55 = vector.broadcast %54 : vector<1x256xf32> to vector<4x256xf32>
    %56 = arith.mulf %53, %55 : vector<4x256xf32>
    %c241_i32 = arith.constant 241 : i32
    %57 = tpu.dynamic_rotate %32 by %c241_i32 dim 1 : vector<4x256xf32>, i32 -> vector<4x256xf32>
    %58 = vector.extract_strided_slice %3 {offsets = [6, 0], sizes = [1, 256], strides = [1, 1]} : vector<9x256xf32> to vector<1x256xf32>
    %59 = vector.broadcast %58 : vector<1x256xf32> to vector<4x256xf32>
    %60 = arith.mulf %57, %59 : vector<4x256xf32>
    %c240_i32 = arith.constant 240 : i32
    %61 = tpu.dynamic_rotate %32 by %c240_i32 dim 1 : vector<4x256xf32>, i32 -> vector<4x256xf32>
    %62 = vector.extract_strided_slice %3 {offsets = [7, 0], sizes = [1, 256], strides = [1, 1]} : vector<9x256xf32> to vector<1x256xf32>
    %63 = vector.broadcast %62 : vector<1x256xf32> to vector<4x256xf32>
    %64 = arith.mulf %61, %63 : vector<4x256xf32>
    %c239_i32 = arith.constant 239 : i32
    %65 = tpu.dynamic_rotate %32 by %c239_i32 dim 1 : vector<4x256xf32>, i32 -> vector<4x256xf32>
    %66 = vector.extract_strided_slice %3 {offsets = [8, 0], sizes = [1, 256], strides = [1, 1]} : vector<9x256xf32> to vector<1x256xf32>
    %67 = vector.broadcast %66 : vector<1x256xf32> to vector<4x256xf32>
    %68 = arith.mulf %65, %67 : vector<4x256xf32>
    %69 = tpu.concatenate %37, %33, %41, %33, %45, %33, %49, %33, %52, %33, %56, %33, %60, %33, %64, %33 in 0 : vector<4x256xf32>, vector<4x256xf32>, vector<4x256xf32>, vector<4x256xf32>, vector<4x256xf32>, vector<4x256xf32>, vector<4x256xf32>, vector<4x256xf32>, vector<4x256xf32>, vector<4x256xf32>, vector<4x256xf32>, vector<4x256xf32>, vector<4x256xf32>, vector<4x256xf32>, vector<4x256xf32>, vector<4x256xf32> -> vector<64x256xf32>
    %70 = tpu.concatenate %68, %33 in 0 : vector<4x256xf32>, vector<4x256xf32> -> vector<8x256xf32>
    %71 = tpu.concatenate %69, %70 in 0 : vector<64x256xf32>, vector<8x256xf32> -> vector<72x256xf32>
    %c0_16 = arith.constant 0 : index
    %c0_17 = arith.constant 0 : index
    %72 = vector.load %arg4[%c0_16, %c0_17] : memref<8x72xf32, #tpu.memory_space<vmem>>, vector<8x72xf32>
    %cst_18 = arith.constant dense<0.000000e+00> : vector<8x256xf32>
    %73 = tpu.matmul %72, %71, %cst_18 {dimension_numbers = #tpu.dot_dimension_numbers<[1], [0], [0], [1], [0, 0, 1, 1], [], []>} : vector<8x72xf32>, vector<72x256xf32>, vector<8x256xf32> -> vector<8x256xf32>
    %c0_19 = arith.constant 0 : index
    %c0_20 = arith.constant 0 : index
    %74 = vector.load %arg5[%c0_19, %c0_20] : memref<8x1xf32, #tpu.memory_space<vmem>>, vector<8x1xf32>
    %75 = vector.broadcast %74 : vector<8x1xf32> to vector<8x256xf32>
    %76 = arith.addf %73, %75 : vector<8x256xf32>
    %c0_21 = arith.constant 0 : index
    %c0_22 = arith.constant 0 : index
    %77 = vector.load %arg7[%c0_21, %c0_22] : memref<8x256xf32, #tpu.memory_space<vmem>>, vector<8x256xf32>
    tpu.vector_store %arg7[%c0_21, %c0_22], %76 {strides = array<i32>} : memref<8x256xf32, #tpu.memory_space<vmem>>, vector<8x256xf32>,
    return
  }
  func.func @transform_0(%arg0: i32) -> (i32, i32) {
    %c0_i32 = arith.constant 0 : i32
    %c0_i32_0 = arith.constant 0 : i32
    return %c0_i32, %arg0 : i32, i32
  }
  func.func @transform_1(%arg0: i32) -> (i32, i32) {
    %c0_i32 = arith.constant 0 : i32
    %c0_i32_0 = arith.constant 0 : i32
    %c0_i32_1 = arith.constant 0 : i32
    return %c0_i32, %c0_i32_0 : i32, i32
  }
  func.func @transform_2(%arg0: i32) -> (i32, i32) {
    %c0_i32 = arith.constant 0 : i32
    %c0_i32_0 = arith.constant 0 : i32
    %c0_i32_1 = arith.constant 0 : i32
    return %c0_i32, %c0_i32_0 : i32, i32
  }
  func.func @transform_3(%arg0: i32) -> (i32, i32) {
    %c0_i32 = arith.constant 0 : i32
    %c0_i32_0 = arith.constant 0 : i32
    %c0_i32_1 = arith.constant 0 : i32
    return %c0_i32, %c0_i32_0 : i32, i32
  }
  func.func @transform_4(%arg0: i32) -> (i32, i32) {
    %c0_i32 = arith.constant 0 : i32
    %c0_i32_0 = arith.constant 0 : i32
    %c0_i32_1 = arith.constant 0 : i32
    return %c0_i32, %c0_i32_0 : i32, i32
  }
  func.func @transform_5(%arg0: i32) -> (i32, i32) {
    %c0_i32 = arith.constant 0 : i32
    %c0_i32_0 = arith.constant 0 : i32
    %c0_i32_1 = arith.constant 0 : i32
    return %c0_i32, %c0_i32_0 : i32, i32
  }
  func.func @transform_6(%arg0: i32) -> (i32, i32) {
    %c0_i32 = arith.constant 0 : i32
    %c0_i32_0 = arith.constant 0 : i32
    return %c0_i32, %arg0 : i32, i32
  }
}

</mosaic_0001>

<llo_original>
// kernel: tpu_custom_call.1
$region0: #{tpu_custom_call.1}
  #allocation0 [shape = 'u32[]', space=smem, size = 0x4, offset = 0x4, fixed_abs, tag = 'smem constant byte address 0x4 - core index']
  #allocation1 [shape = 'u32[144,128]{1,0:T(1,128)}', space=vmem, size = 0x12000, scoped, tag = 'internal scratch']
  %s0 = inlined_call_operand.hbm [shape: f32[4,512], index: 0, kind: input, shape index: {}]
  %s1 = inlined_call_operand.vmem [shape: f32[4,1], index: 1, kind: input, shape index: {}]
  %s2 = inlined_call_operand.vmem [shape: f32[4,1], index: 2, kind: input, shape index: {}]
  %s3 = inlined_call_operand.hbm [shape: f32[8,72], index: 3, kind: input, shape index: {}]
  %s4 = inlined_call_operand.vmem [shape: f32[8,1], index: 4, kind: input, shape index: {}]
  %s5 = inlined_call_operand.vmem [shape: f32[9,256], index: 5, kind: input, shape index: {}]
  %s6 = inlined_call_operand.hbm [shape: f32[8,512], index: 6, kind: output, shape index: {}]
  %s7 = sld [smem:[#allocation0]]
  $region65: #{tpu_custom_call.1} parent=0
    _
  %s9 = ssub.s32 1, %s7
  %s10 = scalar_select 0, %s9, %s7
  $region1: #{tpu_custom_call.1} parent=0
    #allocation2 [shape = 'u8[8192]{0}', space=vmem, size = 0x2000, scoped, tag = 'input window, operand 0']
    #allocation3 [shape = 's32[2]{0}', space=sflag, size = 0x8, scoped, tag = 'scoped memory for tpu_custom_call.1']
    #allocation4 [shape = 's32[2]{0}', space=sflag, size = 0x8, scoped, tag = 'scoped memory for tpu_custom_call.1']
    #allocation5 [shape = 'u8[4096]{0}', space=vmem, size = 0x1000, scoped, tag = 'input window, operand 3, single buffered']
    #allocation6 [shape = 's32[1]{0}', space=sflag, size = 0x4, scoped, tag = 'scoped memory for tpu_custom_call.1']
    #allocation7 [shape = 'u8[16384]{0}', space=vmem, size = 0x4000, scoped, tag = 'output window, operand 0']
    %11 = vsyncpa [#allocation3], 0
    %s12 = scalar_lea.sflag [#allocation3], 1
    %13 = vsyncpa %s12, 0
    %14 = vsyncpa [#allocation6], 0
    %15 = vsyncpa [#allocation4], 0
    %s16 = scalar_lea.sflag [#allocation4], 1
    %17 = vsyncpa %s16, 0
    loop: start=0, step=1, limit=4
    $region2: #{tpu_custom_call.1} parent=1 // loop_pre_header
      _
    $region3: #{tpu_custom_call.1} parent=1 // loop_header
      %s19 = sphi 0, %s23
      %p20 = scmp.ge.s32.totalorder %s19, 4
      %s29 = sphi 0, %s31
      %s32 = sphi 0, %s29
      %s33 = sphi 0, %s32
      %s49 = sphi 0, %s33
      %s53 = sphi 0, %s53
      %s55 = sphi 0, %s53
      %s56 = sphi 0, %s55
      %s70 = sphi 0, %s56
      %s74 = sphi 0, %s74
      %s76 = sphi 0, %s74
      %s77 = sphi 0, %s76
      %s91 = sphi 0, %s77
      %s95 = sphi 0, %s95
      %s97 = sphi 0, %s95
      %s98 = sphi 0, %s97
      %s112 = sphi 0, %s98
      %s116 = sphi 0, %s116
      %s118 = sphi 0, %s116
      %s119 = sphi 0, %s118
      %s133 = sphi 0, %s119
      %s137 = sphi 0, %s137
      %s139 = sphi 0, %s137
      %s140 = sphi 0, %s139
      %s154 = sphi 0, %s140
      %s160 = sphi 0, %s162
      %s163 = sphi 0, %s160
      %s164 = sphi 0, %s163
      %s180 = sphi 0, %s164
    $region4: #{tpu_custom_call.1} parent=1 // loop_header_branch
      %22 = sbr.rel (%p20) target = $region8
    $region5: #{tpu_custom_call.1} parent=1 // loop_body
      %s24 = ssub.s32 %s19, 1
      %s25 = ssub.s32 %s19, 2
      %s26 = sadd.s32 %s19, 1
      %s27 = ssub.s32 %s19, %s26
      %p28 = scmp.eq.s32.totalorder %s27, 0
      %s30 = sadd.s32 %s29, 1
      %s31 = scalar_select %p28, %s29, %s30
      %p34 = pneg %p28
      %p35 = scmp.eq.s32.totalorder %s19, 1
      %p36 = por %p34, %p35
      %p37 = scmp.ne.s32.totalorder %s29, %s32
      %p38 = scmp.eq.s32.totalorder %s19, 0
      %p39 = por %p37, %p38
      %p40 = scmp.ne.s32.totalorder %s29, %s32
      %p41 = scmp.eq.s32.totalorder %s24, 1
      %p42 = por %p40, %p41
      %p43 = scmp.ne.s32.totalorder %s32, %s33
      %p44 = scmp.eq.s32.totalorder %s24, 0
      %p45 = por %p43, %p44
      %p46 = scmp.ne.s32.totalorder %s32, %s33
      %p47 = scmp.eq.s32.totalorder %s25, 1
      %p48 = por %p46, %p47
      %p50 = scmp.ne.s32.totalorder %s33, %s49
      %p51 = scmp.eq.s32.totalorder %s25, 0
      %p52 = por %p50, %p51
      %s54 = sadd.s32 %s53, 1
      %p57 = scmp.eq.s32.totalorder %s19, 1
      %p58 = scmp.ne.s32.totalorder %s53, %s55
      %p59 = scmp.eq.s32.totalorder %s19, 0
      %p60 = por %p58, %p59
      %p61 = scmp.ne.s32.totalorder %s53, %s55
      %p62 = scmp.eq.s32.totalorder %s24, 1
      %p63 = por %p61, %p62
      %p64 = scmp.ne.s32.totalorder %s55, %s56
      %p65 = scmp.eq.s32.totalorder %s24, 0
      %p66 = por %p64, %p65
      %p67 = scmp.ne.s32.totalorder %s55, %s56
      %p68 = scmp.eq.s32.totalorder %s25, 1
      %p69 = por %p67, %p68
      %p71 = scmp.ne.s32.totalorder %s56, %s70
      %p72 = scmp.eq.s32.totalorder %s25, 0
      %p73 = por %p71, %p72
      %s75 = sadd.s32 %s74, 1
      %p78 = scmp.eq.s32.totalorder %s19, 1
      %p79 = scmp.ne.s32.totalorder %s74, %s76
      %p80 = scmp.eq.s32.totalorder %s19, 0
      %p81 = por %p79, %p80
      %p82 = scmp.ne.s32.totalorder %s74, %s76
      %p83 = scmp.eq.s32.totalorder %s24, 1
      %p84 = por %p82, %p83
      %p85 = scmp.ne.s32.totalorder %s76, %s77
      %p86 = scmp.eq.s32.totalorder %s24, 0
      %p87 = por %p85, %p86
      %p88 = scmp.ne.s32.totalorder %s76, %s77
      %p89 = scmp.eq.s32.totalorder %s25, 1
      %p90 = por %p88, %p89
      %p92 = scmp.ne.s32.totalorder %s77, %s91
      %p93 = scmp.eq.s32.totalorder %s25, 0
      %p94 = por %p92, %p93
      %s96 = sadd.s32 %s95, 1
      %p99 = scmp.eq.s32.totalorder %s19, 1
      %p100 = scmp.ne.s32.totalorder %s95, %s97
      %p101 = scmp.eq.s32.totalorder %s19, 0
      %p102 = por %p100, %p101
      %p103 = scmp.ne.s32.totalorder %s95, %s97
      %p104 = scmp.eq.s32.totalorder %s24, 1
      %p105 = por %p103, %p104
      %p106 = scmp.ne.s32.totalorder %s97, %s98
      %p107 = scmp.eq.s32.totalorder %s24, 0
      %p108 = por %p106, %p107
      %p109 = scmp.ne.s32.totalorder %s97, %s98
      %p110 = scmp.eq.s32.totalorder %s25, 1
      %p111 = por %p109, %p110
      %p113 = scmp.ne.s32.totalorder %s98, %s112
      %p114 = scmp.eq.s32.totalorder %s25, 0
      %p115 = por %p113, %p114
      %s117 = sadd.s32 %s116, 1
      %p120 = scmp.eq.s32.totalorder %s19, 1
      %p121 = scmp.ne.s32.totalorder %s116, %s118
      %p122 = scmp.eq.s32.totalorder %s19, 0
      %p123 = por %p121, %p122
      %p124 = scmp.ne.s32.totalorder %s116, %s118
      %p125 = scmp.eq.s32.totalorder %s24, 1
      %p126 = por %p124, %p125
      %p127 = scmp.ne.s32.totalorder %s118, %s119
      %p128 = scmp.eq.s32.totalorder %s24, 0
      %p129 = por %p127, %p128
      %p130 = scmp.ne.s32.totalorder %s118, %s119
      %p131 = scmp.eq.s32.totalorder %s25, 1
      %p132 = por %p130, %p131
      %p134 = scmp.ne.s32.totalorder %s119, %s133
      %p135 = scmp.eq.s32.totalorder %s25, 0
      %p136 = por %p134, %p135
      %s138 = sadd.s32 %s137, 1
      %p141 = scmp.eq.s32.totalorder %s19, 1
      %p142 = scmp.ne.s32.totalorder %s137, %s139
      %p143 = scmp.eq.s32.totalorder %s19, 0
      %p144 = por %p142, %p143
      %p145 = scmp.ne.s32.totalorder %s137, %s139
      %p146 = scmp.eq.s32.totalorder %s24, 1
      %p147 = por %p145, %p146
      %p148 = scmp.ne.s32.totalorder %s139, %s140
      %p149 = scmp.eq.s32.totalorder %s24, 0
      %p150 = por %p148, %p149
      %p151 = scmp.ne.s32.totalorder %s139, %s140
      %p152 = scmp.eq.s32.totalorder %s25, 1
      %p153 = por %p151, %p152
      %p155 = scmp.ne.s32.totalorder %s140, %s154
      %p156 = scmp.eq.s32.totalorder %s25, 0
      %p157 = por %p155, %p156
      %s158 = ssub.s32 %s19, %s26
      %p159 = scmp.eq.s32.totalorder %s158, 0
      %s161 = sadd.s32 %s160, 1
      %s162 = scalar_select %p159, %s160, %s161
      %p165 = pneg %p159
      %p166 = scmp.eq.s32.totalorder %s19, 1
      %p167 = por %p165, %p166
      %p168 = scmp.ne.s32.totalorder %s160, %s163
      %p169 = scmp.eq.s32.totalorder %s19, 0
      %p170 = por %p168, %p169
      %p171 = scmp.ne.s32.totalorder %s160, %s163
      %p172 = scmp.eq.s32.totalorder %s24, 1
      %p173 = por %p171, %p172
      %p174 = scmp.ne.s32.totalorder %s163, %s164
      %p175 = scmp.eq.s32.totalorder %s24, 0
      %p176 = por %p174, %p175
      %p177 = scmp.ne.s32.totalorder %s163, %s164
      %p178 = scmp.eq.s32.totalorder %s25, 1
      %p179 = por %p177, %p178
      %p181 = scmp.ne.s32.totalorder %s164, %s180
      %p182 = scmp.eq.s32.totalorder %s25, 0
      %p183 = por %p181, %p182
      %p184 = scmp.le.s32.totalorder 1, %s19
      %p185 = scmp.lt.s32.totalorder %s19, 3
      %p186 = pnand %p184, %p185
      %p187 = pneg %p186
      // Predicated region
      $region9: #{tpu_custom_call.1} parent=5 // pred_check
        _
      $region10: #{tpu_custom_call.1} parent=5 // pred_check_branch
        %189 = sbr.rel (%p186) target = $region12
      $region11: #{tpu_custom_call.1} parent=5 // pred_region
        %s190 = ssub.s32 %s19, 1
        // Predicated region
        $region13: #{tpu_custom_call.1} parent=11 // pred_check
          %p191 = pneg %p66
        $region14: #{tpu_custom_call.1} parent=11 // pred_check_branch
          %193 = sbr.rel (%p191) target = $region16
        $region15: #{tpu_custom_call.1} parent=11 // pred_region
          _
        $region16: #{tpu_custom_call.1} parent=11 // pred_fallthru
          _
        // Predicated region
        $region17: #{tpu_custom_call.1} parent=11 // pred_check
          %p194 = pneg %p87
        $region18: #{tpu_custom_call.1} parent=11 // pred_check_branch
          %196 = sbr.rel (%p194) target = $region20
        $region19: #{tpu_custom_call.1} parent=11 // pred_region
          _
        $region20: #{tpu_custom_call.1} parent=11 // pred_fallthru
          _
        // Predicated region
        $region21: #{tpu_custom_call.1} parent=11 // pred_check
          %p197 = pneg %p108
        $region22: #{tpu_custom_call.1} parent=11 // pred_check_branch
          %199 = sbr.rel (%p197) target = $region24
        $region23: #{tpu_custom_call.1} parent=11 // pred_region
          %s201 = ssub.s32 128, 128
          %202 = vsyncadd [#allocation6], %s201
          %s204 = sshll.u32 [#allocation5], 4
          %s205 = int_to_ptr.vmem [resolvable:$true] %s204
          %207 = dma.hbm_to_vmem [thread:$0]  %s3, 128, %s205, [#allocation6]
        $region24: #{tpu_custom_call.1} parent=11 // pred_fallthru
          _
        // Predicated region
        $region25: #{tpu_custom_call.1} parent=11 // pred_check
          %p208 = pneg %p129
        $region26: #{tpu_custom_call.1} parent=11 // pred_check_branch
          %210 = sbr.rel (%p208) target = $region28
        $region27: #{tpu_custom_call.1} parent=11 // pred_region
          _
        $region28: #{tpu_custom_call.1} parent=11 // pred_fallthru
          _
        // Predicated region
        $region29: #{tpu_custom_call.1} parent=11 // pred_check
          %p211 = pneg %p150
        $region30: #{tpu_custom_call.1} parent=11 // pred_check_branch
          %213 = sbr.rel (%p211) target = $region32
        $region31: #{tpu_custom_call.1} parent=11 // pred_region
          _
        $region32: #{tpu_custom_call.1} parent=11 // pred_fallthru
          _
      $region12: #{tpu_custom_call.1} parent=5 // pred_fallthru
        _
      %p214 = scmp.lt.s32.totalorder %s19, 2
      // Predicated region
      $region33: #{tpu_custom_call.1} parent=5 // pred_check
        %p215 = pneg %p214
      $region34: #{tpu_custom_call.1} parent=5 // pred_check_branch
        %217 = sbr.rel (%p215) target = $region36
      $region35: #{tpu_custom_call.1} parent=5 // pred_region
        // Predicated region
        $region37: #{tpu_custom_call.1} parent=35 // pred_check
          %p218 = pneg %p39
        $region38: #{tpu_custom_call.1} parent=35 // pred_check_branch
          %220 = sbr.rel (%p218) target = $region40
        $region39: #{tpu_custom_call.1} parent=35 // pred_region
          %s221 = sand.u32 %s29, 1
          %s222 = scalar_lea.sflag [#allocation3], %s221
          %s223 = sand.u32 %s29, 1
          %s224 = smul.addr %s223, 8
          %s225 = scalar_lea.vmem [#allocation2], %s224
          %s226 = smul.u32 2, %s19
          %s228 = ssub.s32 128, 128
          %229 = vsyncadd %s222, %s228
          %s230 = smul.addr %s226, 64
          %s231 = scalar_lea.hbm %s0, %s230
          %s233 = sshll.u32 %s225, 4
          %s234 = int_to_ptr.vmem [resolvable:$true] %s233
          %236 = dma.hbm_to_vmem [thread:$0]  %s231, 128, %s234, %s222
        $region40: #{tpu_custom_call.1} parent=35 // pred_fallthru
          _
      $region36: #{tpu_custom_call.1} parent=5 // pred_fallthru
        _
      %p237 = scmp.le.s32.totalorder 1, %s19
      %p238 = scmp.lt.s32.totalorder %s19, 3
      %p239 = pnand %p237, %p238
      %p240 = pneg %p239
      // Predicated region
      $region41: #{tpu_custom_call.1} parent=5 // pred_check
        _
      $region42: #{tpu_custom_call.1} parent=5 // pred_check_branch
        %242 = sbr.rel (%p239) target = $region44
      $region43: #{tpu_custom_call.1} parent=5 // pred_region
        %s243 = ssub.s32 %s19, 1
        %s244 = sand.u32 %s32, 1
        %s245 = scalar_lea.sflag [#allocation3], %s244
        %s246 = sand.u32 %s32, 1
        %s247 = smul.addr %s246, 8
        %s248 = scalar_lea.vmem [#allocation2], %s247
        // Predicated region
        $region45: #{tpu_custom_call.1} parent=43 // pred_check
          %p249 = pneg %p45
        $region46: #{tpu_custom_call.1} parent=43 // pred_check_branch
          %251 = sbr.rel (%p249) target = $region48
        $region47: #{tpu_custom_call.1} parent=43 // pred_region
          %252 = dma.done %s245, 128
        $region48: #{tpu_custom_call.1} parent=43 // pred_fallthru
          _
        // Predicated region
        $region49: #{tpu_custom_call.1} parent=43 // pred_check
          %p253 = pneg %p108
        $region50: #{tpu_custom_call.1} parent=43 // pred_check_branch
          %255 = sbr.rel (%p253) target = $region52
        $region51: #{tpu_custom_call.1} parent=43 // pred_region
          %256 = dma.done [#allocation6], 128
        $region52: #{tpu_custom_call.1} parent=43 // pred_fallthru
          _
        %s257 = sand.u32 %s32, 1
        %s258 = scalar_lea.sflag [#allocation3], %s257
        %s259 = sand.u32 %s32, 1
        %s260 = smul.addr %s259, 8
        %s261 = scalar_lea.vmem [#allocation2], %s260
        %p262 = pneg %p45
        %p263 = pneg %p42
        %p264 = pneg %p66
        %p265 = pneg %p63
        %p266 = pneg %p87
        %p267 = pneg %p84
        %p268 = pneg %p108
        %p269 = pneg %p105
        %p270 = pneg %p129
        %p271 = pneg %p126
        %p272 = pneg %p150
        %p273 = pneg %p147
        %p274 = pneg %p176
        %p275 = pneg %p173
        %s276 = sand.u32 %s163, 1
        %s277 = scalar_lea.sflag [#allocation4], %s276
        %s278 = sand.u32 %s163, 1
        %s279 = smul.addr %s278, 16
        %s280 = scalar_lea.vmem [#allocation7], %s279
        %s281 = smul.u32 2, %s24
        %s282 = smul.u32 2, %s24
        %v283 = vld [vmem:[%s248] sm:$0xff]
        %v284 = vld [vmem:[%s1] sm:$0xf]
        %v285 = vld [vmem:[%s2] sm:$0xf]
        %v286 = vld [vmem:[%s5] sm:$0xff]
        %v287 = vld [vmem:[%s5 + $0x8] sm:$0xff]
        %v288 = vld [vmem:[%s5 + $0x10] sm:$0x1]
        %v289 = vld [vmem:[%s5 + $0x18] sm:$0x1]
        %v291 = vcombine.high %v283, %v283
        %vm293 = vcmask 1043456
        %v294 = vsel %vm293, %v283, 0.0
        %v295 = vsel %vm293, %v291, 0.0
        %v296 = vadd.f32 %v294, %v295
        %297 = vadd.xlane.f32.xlu0 %v296
        %v298 = vpop.xlane.xlu0 %297
        %v299 = vsel %vm293, %v298, 0.0
        %v300 = vrot.slane %v299, 4
        %v301 = vadd.f32 %v299, %v300
        %v302 = vrot.slane %v301, 2
        %v303 = vadd.f32 %v301, %v302
        %v304 = vrot.slane %v303, 1
        %v305 = vadd.f32 %v303, %v304
        %v306 = vmul.f32 %v305, 0.0009765625
        %v307 = vsub.f32 %v283, %v306
        %v308 = vmul.f32 %v307, %v307
        %v310 = vcombine.high %v308, %v308
        %v312 = vsel %vm293, %v308, 0.0
        %v313 = vsel %vm293, %v310, 0.0
        %v314 = vadd.f32 %v312, %v313
        %315 = vadd.xlane.f32.xlu0 %v314
        %v316 = vpop.xlane.xlu0 %315
        %v317 = vsel %vm293, %v316, 0.0
        %v318 = vrot.slane %v317, 4
        %v319 = vadd.f32 %v317, %v318
        %v320 = vrot.slane %v319, 2
        %v321 = vadd.f32 %v319, %v320
        %v322 = vrot.slane %v321, 1
        %v323 = vadd.f32 %v321, %v322
        %v324 = vmul.f32 %v323, 0.0009765625
        %v325 = vadd.f32 %v324, 1e-05
        %v326 = vrsqrt.pop %v325
        %v327 = vmul.f32 %v307, %v326
        %329 = vset.pattern.permute.xlu0 0
        %330 = vperm.xlu0 %329, %v284
        %v331 = vpop.permute.xlu0 %330
        %v333 = vunpack.c.l.s4 839922192
        %v334 = vunpack.c.0.s8 %v333
        %v335 = vlaneseq
        %v336 = vshrl.u32 %v335, 7
        %v337 = vsub.s32 %v334, %v336
        %v338 = vrot.slane %v331, %v337
        %v340 = vmul.f32 %v327, %v338
        %342 = vset.pattern.permute.xlu0 0
        %343 = vperm.xlu0 %342, %v285
        %v344 = vpop.permute.xlu0 %343
        %v346 = vunpack.c.l.s4 839922192
        %v347 = vunpack.c.0.s8 %v346
        %v348 = vlaneseq
        %v349 = vshrl.u32 %v348, 7
        %v350 = vsub.s32 %v347, %v349
        %v351 = vrot.slane %v344, %v350
        %v353 = vadd.f32 %v340, %v351
        %vm354 = vcmp.ge.f32.partialorder %v353, 0.0
        %v355 = vmul.f32 %v353, 0.01
        %v356 = vsel %vm354, %v353, %v355
        %v358 = vcombine.high %v356, %v356
        %360 = vrot.lane.b32.xlu0 %v356, 17
        %v361 = vpop.permute.xlu0 %360
        %362 = vrot.lane.b32.xlu0 %v358, 17
        %v363 = vpop.permute.xlu0 %362
        %v364 = vlaneseq
        %v365 = vand.u32 %v364, 127
        %vm366 = vcmp.lt.s32.totalorder %v365, 17
        %v367 = vsel %vm366, %v361, %v363
        %v368 = vsel %vm366, %v363, %v361
        %v369 = vlaneseq
        %v370 = vshrl.u32 %v369, 7
        %v371 = vsub.s32 0, %v370
        %v372 = vrot.slane %v286, %v371
        %v373 = vlaneseq
        %v374 = vshrl.u32 %v373, 7
        %v375 = vsub.s32 0, %v374
        %v376 = vrot.slane %v287, %v375
        %v377 = vmul.f32 %v368, %v372
        %v378 = vmul.f32 %v367, %v376
        %379 = vrot.lane.b32.xlu0 %v356, 16
        %v380 = vpop.permute.xlu0 %379
        %381 = vrot.lane.b32.xlu0 %v358, 16
        %v382 = vpop.permute.xlu0 %381
        %vm383 = vcmp.lt.s32.totalorder %v365, 16
        %v384 = vsel %vm383, %v380, %v382
        %v385 = vsel %vm383, %v382, %v380
        %v386 = vlaneseq
        %v387 = vshrl.u32 %v386, 7
        %v388 = vsub.s32 1, %v387
        %v389 = vrot.slane %v286, %v388
        %v390 = vlaneseq
        %v391 = vshrl.u32 %v390, 7
        %v392 = vsub.s32 1, %v391
        %v393 = vrot.slane %v287, %v392
        %v394 = vmul.f32 %v385, %v389
        %v395 = vmul.f32 %v384, %v393
        %396 = vrot.lane.b32.xlu0 %v356, 15
        %v397 = vpop.permute.xlu0 %396
        %398 = vrot.lane.b32.xlu0 %v358, 15
        %v399 = vpop.permute.xlu0 %398
        %vm400 = vcmp.lt.s32.totalorder %v365, 15
        %v401 = vsel %vm400, %v397, %v399
        %v402 = vsel %vm400, %v399, %v397
        %v403 = vlaneseq
        %v404 = vshrl.u32 %v403, 7
        %v405 = vsub.s32 2, %v404
        %v406 = vrot.slane %v286, %v405
        %v407 = vlaneseq
        %v408 = vshrl.u32 %v407, 7
        %v409 = vsub.s32 2, %v408
        %v410 = vrot.slane %v287, %v409
        %v411 = vmul.f32 %v402, %v406
        %v412 = vmul.f32 %v401, %v410
        %413 = vrot.lane.b32.xlu0 %v356, 1
        %v414 = vpop.permute.xlu0 %413
        %415 = vrot.lane.b32.xlu0 %v358, 1
        %v416 = vpop.permute.xlu0 %415
        %vm417 = vcmp.lt.s32.totalorder %v365, 1
        %v418 = vsel %vm417, %v414, %v416
        %v419 = vsel %vm417, %v416, %v414
        %v420 = vlaneseq
        %v421 = vshrl.u32 %v420, 7
        %v422 = vsub.s32 3, %v421
        %v423 = vrot.slane %v286, %v422
        %v424 = vlaneseq
        %v425 = vshrl.u32 %v424, 7
        %v426 = vsub.s32 3, %v425
        %v427 = vrot.slane %v287, %v426
        %v428 = vmul.f32 %v419, %v423
        %v429 = vmul.f32 %v418, %v427
        %v430 = vlaneseq
        %v431 = vshrl.u32 %v430, 7
        %v432 = vsub.s32 4, %v431
        %v433 = vrot.slane %v286, %v432
        %v434 = vlaneseq
        %v435 = vshrl.u32 %v434, 7
        %v436 = vsub.s32 4, %v435
        %v437 = vrot.slane %v287, %v436
        %v440 = vcombine.low %v433, %v437
        %v442 = vmul.f32 %v356, %v440
        %443 = vrot.lane.b32.xlu0 %v356, 127
        %v444 = vpop.permute.xlu0 %443
        %445 = vrot.lane.b32.xlu0 %v358, 127
        %v446 = vpop.permute.xlu0 %445
        %vm447 = vcmp.lt.s32.totalorder %v365, 127
        %v448 = vsel %vm447, %v444, %v446
        %v449 = vsel %vm447, %v446, %v444
        %v450 = vlaneseq
        %v451 = vshrl.u32 %v450, 7
        %v452 = vsub.s32 5, %v451
        %v453 = vrot.slane %v286, %v452
        %v454 = vlaneseq
        %v455 = vshrl.u32 %v454, 7
        %v456 = vsub.s32 5, %v455
        %v457 = vrot.slane %v287, %v456
        %v458 = vmul.f32 %v448, %v453
        %v459 = vmul.f32 %v449, %v457
        %460 = vrot.lane.b32.xlu0 %v356, 113
        %v461 = vpop.permute.xlu0 %460
        %462 = vrot.lane.b32.xlu0 %v358, 113
        %v463 = vpop.permute.xlu0 %462
        %vm464 = vcmp.lt.s32.totalorder %v365, 113
        %v465 = vsel %vm464, %v461, %v463
        %v466 = vsel %vm464, %v463, %v461
        %v467 = vlaneseq
        %v468 = vshrl.u32 %v467, 7
        %v469 = vsub.s32 6, %v468
        %v470 = vrot.slane %v286, %v469
        %v471 = vlaneseq
        %v472 = vshrl.u32 %v471, 7
        %v473 = vsub.s32 6, %v472
        %v474 = vrot.slane %v287, %v473
        %v475 = vmul.f32 %v465, %v470
        %v476 = vmul.f32 %v466, %v474
        %477 = vrot.lane.b32.xlu0 %v356, 112
        %v478 = vpop.permute.xlu0 %477
        %479 = vrot.lane.b32.xlu0 %v358, 112
        %v480 = vpop.permute.xlu0 %479
        %vm481 = vcmp.lt.s32.totalorder %v365, 112
        %v482 = vsel %vm481, %v478, %v480
        %v483 = vsel %vm481, %v480, %v478
        %v484 = vlaneseq
        %v485 = vshrl.u32 %v484, 7
        %v486 = vsub.s32 7, %v485
        %v487 = vrot.slane %v286, %v486
        %v488 = vlaneseq
        %v489 = vshrl.u32 %v488, 7
        %v490 = vsub.s32 7, %v489
        %v491 = vrot.slane %v287, %v490
        %v492 = vmul.f32 %v482, %v487
        %v493 = vmul.f32 %v483, %v491
        %494 = vrot.lane.b32.xlu0 %v356, 111
        %v495 = vpop.permute.xlu0 %494
        %496 = vrot.lane.b32.xlu0 %v358, 111
        %v497 = vpop.permute.xlu0 %496
        %vm498 = vcmp.lt.s32.totalorder %v365, 111
        %v499 = vsel %vm498, %v495, %v497
        %v500 = vsel %vm498, %v497, %v495
        %v501 = vlaneseq
        %v502 = vshrl.u32 %v501, 7
        %v503 = vsub.s32 0, %v502
        %v504 = vrot.slane %v288, %v503
        %v505 = vlaneseq
        %v506 = vshrl.u32 %v505, 7
        %v507 = vsub.s32 0, %v506
        %v508 = vrot.slane %v289, %v507
        %v509 = vmul.f32 %v499, %v504
        %v510 = vmul.f32 %v500, %v508
        %v512 = vcombine.high %v442, %v442
        %v514 = vsel %vm293, %v377, 0.0
        %v515 = vsel %vm293, %v378, 0.0
        %v516 = vsel %vm293, %v394, 0.0
        %v517 = vsel %vm293, %v395, 0.0
        %v518 = vsel %vm293, %v411, 0.0
        %v519 = vsel %vm293, %v412, 0.0
        %v520 = vsel %vm293, %v428, 0.0
        %v521 = vsel %vm293, %v429, 0.0
        %v522 = vsel %vm293, %v442, 0.0
        %v523 = vsel %vm293, %v512, 0.0
        %v524 = vsel %vm293, %v458, 0.0
        %v525 = vsel %vm293, %v459, 0.0
        %v526 = vsel %vm293, %v475, 0.0
        %v527 = vsel %vm293, %v476, 0.0
        %v528 = vsel %vm293, %v492, 0.0
        %v529 = vsel %vm293, %v493, 0.0
        %v530 = vsel %vm293, %v509, 0.0
        %v531 = vsel %vm293, %v510, 0.0
        %v532 = vld [vmem:[#allocation5] sm:$0xff]
        %v533 = vld [vmem:[%s4] sm:$0xff]
        %535 = vset.pattern.permute.xlu0 0
        %536 = vperm.xlu0 %535, %v533
        %v537 = vpop.permute.xlu0 %536
        %vm539 = vcmask 588800
        %v541 = vsel %vm539, %v532, 0
        %543 = vmatprep.subr.mxu0 %v515
        %544 = vmatpush1.msra.mxu0 %v514
        %545 = vmatprep.subr.mxu0 %v517
        %546 = vmatpush1.msra.mxu0 %v516
        %547 = vmatprep.subr.mxu0 %v519
        %548 = vmatpush1.msra.mxu0 %v518
        %549 = vmatprep.subr.mxu0 %v521
        %550 = vmatpush1.msra.mxu0 %v520
        %551 = vmatprep.subr.mxu0 %v523
        %552 = vmatpush1.msra.mxu0 %v522
        %553 = vmatprep.subr.mxu0 %v525
        %554 = vmatpush1.msra.mxu0 %v524
        %555 = vmatprep.subr.mxu0 %v527
        %556 = vmatpush1.msra.mxu0 %v526
        %557 = vmatprep.subr.mxu0 %v529
        %558 = vmatpush1.msra.mxu0 %v528
        %559 = vmatprep.subr.mxu0 %v531
        %560 = vmatpush1.msra.mxu0 %v530
        %561 = vmatprep.subr.mxu0 0.0
        %562 = vmatpush1.msra.mxu0 0.0
        %563 = vmatprep.subr.mxu0 0.0
        %564 = vmatpush1.msra.mxu0 0.0
        %565 = vmatprep.subr.mxu0 0.0
        %566 = vmatpush1.msra.mxu0 0.0
        %567 = vmatprep.subr.mxu0 0.0
        %568 = vmatpush1.msra.mxu0 0.0
        %569 = vmatprep.subr.mxu0 0.0
        %570 = vmatpush1.msra.mxu0 0.0
        %571 = vmatprep.subr.mxu0 0.0
        %572 = vmatpush1.msra.mxu0 0.0
        %573 = vmatprep.subr.mxu0 0.0
        %574 = vmatpush1.msra.mxu0 0.0
        %575 = vmatprep.subr.mxu0 0.0
        %576 = vmatpush1.msra.mxu0 0.0
        %577 = vmatprep.subr.mxu0 0.0
        %578 = vmatpush1.msra.mxu0 0.0
        %579 = vmatprep.subr.mxu0 0.0
        %580 = vmatpush1.msra.mxu0 0.0
        %581 = vmatprep.subr.mxu0 0.0
        %582 = vmatpush1.msra.mxu0 0.0
        %583 = vmatprep.subr.mxu0 0.0
        %584 = vmatpush1.msra.mxu0 0.0
        %585 = vmatprep.subr.mxu0 0.0
        %586 = vmatpush1.msra.mxu0 0.0
        %587 = vmatprep.subr.mxu0 0.0
        %588 = vmatpush1.msra.mxu0 0.0
        %589 = vmatprep.subr.mxu0 0.0
        %590 = vmatpush1.msra.mxu0 0.0
        %591 = vmatprep.subr.mxu0 0.0
        %592 = vmatpush1.msra.mxu0 0.0
        %593 = vmatprep.subr.mxu0 0.0
        %594 = vmatpush1.msra.mxu0 0.0
        %595 = vmatprep.subr.mxu0 0.0
        %596 = vmatpush1.msra.mxu0 0.0
        %597 = vmatprep.subr.mxu0 0.0
        %598 = vmatpush1.msra.mxu0 0.0
        %599 = vmatprep.subr.mxu0 0.0
        %600 = vmatpush1.msra.mxu0 0.0
        %601 = vmatprep.subr.mxu0 0.0
        %602 = vmatpush1.msra.mxu0 0.0
        %603 = vmatprep.subr.mxu0 0.0
        %604 = vmatpush1.msra.mxu0 0.0
        %605 = vmatprep.subr.mxu0 0.0
        %606 = vmatpush1.msra.mxu0 0.0
        %607 = vmatprep.mubr.f32.mxu0 0.0
        %608 = vmatmul.mubr.f32.gmra.mrb[0].mxu0 %v541
        %v609 = vpop.f32.mrb[0].mxu0
        %v610 = vadd.f32 %v537, %v609
        %v611 = vpop.f32.mrb[0].mxu0
        %v612 = vadd.f32 %v537, %v611
        %613 = vdwg.mxu0
        %614 = vst [vmem:[%s280] sm:$0xff] %v610
        %615 = vst [vmem:[%s280 + $0x8] sm:$0xff] %v612
        %s616 = sand.u32 %s163, 1
        %s617 = scalar_lea.sflag [#allocation4], %s616
        %s618 = sand.u32 %s163, 1
        %s619 = smul.addr %s618, 16
        %s620 = scalar_lea.vmem [#allocation7], %s619
        // Predicated region
        $region53: #{tpu_custom_call.1} parent=43 // pred_check
          %p621 = pneg %p173
        $region54: #{tpu_custom_call.1} parent=43 // pred_check_branch
          %623 = sbr.rel (%p621) target = $region56
        $region55: #{tpu_custom_call.1} parent=43 // pred_region
          %s624 = smul.u32 2, %s24
          %s626 = ssub.s32 256, 256
          %627 = vsyncadd %s617, %s626
          %s628 = smul.addr %s624, 128
          %s629 = scalar_lea.hbm %s6, %s628
          %s631 = sshll.u32 %s620, 4
          %s632 = int_to_ptr.vmem [resolvable:$true] %s631
          %634 = dma.vmem_to_hbm [thread:$0]  %s632, 256, %s629, %s617
        $region56: #{tpu_custom_call.1} parent=43 // pred_fallthru
          _
      $region44: #{tpu_custom_call.1} parent=5 // pred_fallthru
        _
      %p635 = scmp.le.s32.totalorder 2, %s19
      // Predicated region
      $region57: #{tpu_custom_call.1} parent=5 // pred_check
        %p636 = pneg %p635
      $region58: #{tpu_custom_call.1} parent=5 // pred_check_branch
        %638 = sbr.rel (%p636) target = $region60
      $region59: #{tpu_custom_call.1} parent=5 // pred_region
        %s639 = ssub.s32 %s19, 2
        // Predicated region
        $region61: #{tpu_custom_call.1} parent=59 // pred_check
          %p640 = pneg %p179
        $region62: #{tpu_custom_call.1} parent=59 // pred_check_branch
          %642 = sbr.rel (%p640) target = $region64
        $region63: #{tpu_custom_call.1} parent=59 // pred_region
          %s643 = sand.u32 %s164, 1
          %s644 = scalar_lea.sflag [#allocation4], %s643
          %s645 = sand.u32 %s164, 1
          %s646 = smul.addr %s645, 16
          %s647 = scalar_lea.vmem [#allocation7], %s646
          %648 = dma.done %s644, 256
        $region64: #{tpu_custom_call.1} parent=59 // pred_fallthru
          _
      $region60: #{tpu_custom_call.1} parent=5 // pred_fallthru
        _
    $region6: #{tpu_custom_call.1} parent=1 // loop_footer
      %s23 = sadd.s32 1, %s19
    $region7: #{tpu_custom_call.1} parent=1 // loop_footer_branch
      %18 = sbr.rel target = $region3
    $region8: #{tpu_custom_call.1} parent=1 // loop_exit
      _
    %649 = vsyncpa [#allocation3], 1
    %s650 = scalar_lea.sflag [#allocation3], 1
    %651 = vsyncpa %s650, 1
    %652 = vsyncpa [#allocation6], 1
    %653 = vsyncpa [#allocation4], 1
    %s654 = scalar_lea.sflag [#allocation4], 1
    %655 = vsyncpa %s654, 1

</llo_original>
